<compile_context>
chip_gen: v5e
topology: v5e:2x2
jax: 0.10.0
libtpu: 0.0.40
codegen_flags: <defaults>
</compile_context>

<pallas_src>
import functools
from typing import NamedTuple

import jax
import jax.numpy as jnp
from jax.experimental import pallas as pl
from jax.experimental.pallas import tpu as pltpu


def _round_up(v, m):
    return ((v + m - 1) // m) * m


class EncoderParams(NamedTuple):
    w1: jax.Array   # (D, Hp)     compute dtype, zero-padded columns
    b1: jax.Array   # (1, Hp)     f32, zero-padded
    wh: jax.Array   # (Hp, 2*Zp)  compute dtype, fused [mu | var], zero-padded
    bh: jax.Array   # (1, 2*Zp)   f32, fused [mu | var], zero-padded
    z_dim: int      # real latent dim Z
    z_pad: int      # lane-aligned latent dim Zp (multiple of 128)


def encoder_kernel(x_ref, w1_ref, b1_ref, wh_ref, bh_ref, out_ref, *, zp):
    """One batch tile of the VAE encoder forward.

    x_ref   : (TB, D)      input tile (compute dtype)
    w1_ref  : (D, Hp)      first linear weight [in, out]
    b1_ref  : (1, Hp)      first linear bias (f32)
    wh_ref  : (Hp, 2*Zp)   fused [mu | var] head weight
    bh_ref  : (1, 2*Zp)    fused [mu | var] head bias (f32)
    out_ref : (TB, 2*Zp)   [:, :Zp] = normalized z_mu, [:, Zp:] = z_var
    """
    # hidden = relu(x @ W1 + b1): MXU matmul with f32 accumulate, VPU bias+relu.
    hidden = jnp.dot(x_ref[...], w1_ref[...], preferred_element_type=jnp.float32)
    hidden = jnp.maximum(hidden + b1_ref[...], 0.0)

    # Fused head matmul (TB, Hp) @ (Hp, 2*Zp). Cast hidden back to the weight
    # dtype (bf16 path) so the MXU runs at native rate; accumulate in f32.
    heads = jnp.dot(hidden.astype(wh_ref.dtype), wh_ref[...],
                    preferred_element_type=jnp.float32)
    heads = heads + bh_ref[...]

    # Zp is a multiple of 128, so both halves are vreg-aligned static slices:
    # no iota/where masking, and the reduction only spans the mu vregs.
    mu = heads[:, :zp]
    var = heads[:, zp:]

    # L2-normalize mu; rsqrt runs on the EUP (overlaps MXU/VPU work).
    # NOTE: like the PyTorch reference, no epsilon -- an all-zero mu row would
    # produce non-finite values (matches module semantics).
    inv_norm = jax.lax.rsqrt(jnp.sum(mu * mu, axis=1, keepdims=True))

    # Two full-width, 128-aligned stores (no masked partial stores).
    out_ref[:, :zp] = mu * inv_norm
    out_ref[:, zp:] = var + 1.0


def prepare_params(params, *, compute_dtype=jnp.bfloat16):
    """One-time layout plumbing: fuse the mu/var heads and pad to lane-aligned
    shapes. Do this once (not per forward call)."""
    w1, b1, wmu, bmu, wvar, bvar = params
    D, H = w1.shape
    Z = wmu.shape[1]
    Hp = _round_up(H, 128)
    Zp = _round_up(Z, 128)

    w1p = jnp.pad(w1, ((0, 0), (0, Hp - H))).astype(compute_dtype)
    b1p = jnp.pad(b1, ((0, 0), (0, Hp - H))).astype(jnp.float32)

    def pad_head(w):  # (H, Z) -> (Hp, Zp), zero-padded
        return jnp.pad(w, ((0, Hp - H), (0, Zp - Z)))

    wh = jnp.concatenate([pad_head(wmu), pad_head(wvar)], axis=1).astype(compute_dtype)
    bh = jnp.concatenate(
        [jnp.pad(bmu, ((0, 0), (0, Zp - Z))),
         jnp.pad(bvar, ((0, 0), (0, Zp - Z)))],
        axis=1,
    ).astype(jnp.float32)
    return EncoderParams(w1p, b1p, wh, bh, Z, Zp)


def _vmem_budget_bytes():
    """~75% of this chip's physical VMEM (64 MiB v7x, 128 MiB v5e/v6e)."""
    cap = 64 * 2**20
    try:
        cap = int(getattr(pltpu.get_tpu_info(), "vmem_capacity_bytes", cap))
    except Exception:
        pass
    return (cap * 3) // 4


def _vmem_estimate(tb, D, Hp, Zp, w_bytes):
    """Rough per-kernel VMEM footprint (bytes), with 2x slack."""
    f32 = 4
    est = (
        2 * tb * D * w_bytes                 # double-buffered x tiles
        + 2 * tb * 2 * Zp * f32              # double-buffered out tiles
        + (D * Hp + Hp * 2 * Zp) * w_bytes   # single-buffered weights
        + (Hp + 2 * Zp) * f32                # biases
        + tb * Hp * (f32 + w_bytes)          # hidden (f32) + cast copy for dot 2
        + tb * 2 * Zp * f32                  # heads temporary
    )
    return 2 * est


def encoder_forward(x, prep: EncoderParams, *, block_b=1024):
    """x: [B, D] float -> (z_mu [B, Z], z_var [B, Z]) in float32."""
    w1, b1, wh, bh = prep.w1, prep.b1, prep.wh, prep.bh
    Z, Zp = prep.z_dim, prep.z_pad
    B, D = x.shape
    Hp = w1.shape[1]
    w_bytes = jnp.dtype(w1.dtype).itemsize
    budget = _vmem_budget_bytes()

    # Batch tile: largest multiple of 8 that fits the VMEM budget; keep >= 2
    # tiles whenever the batch allows so ("parallel",) can shard across the
    # two TensorCores on v7x (one extra tiny grid step on single-TC chips).
    tb = max(8, (min(block_b, B) // 8) * 8)
    if _round_up(B, tb) // tb < 2 and B >= 16:
        tb = max(8, ((tb // 2) // 8) * 8)
    while _vmem_estimate(tb, D, Hp, Zp, w_bytes) > budget and tb > 8:
        tb = max(8, ((tb // 2) // 8) * 8)

    bp = _round_up(B, tb)
    grid = (bp // tb,)

    x_c = x.astype(w1.dtype)  # bf16 input halves x HBM traffic (f32 accum in kernel)
    if bp != B:
        x_c = jnp.pad(x_c, ((0, bp - B), (0, 0)))

    vmem_limit = int(min(max(_vmem_estimate(tb, D, Hp, Zp, w_bytes), 16 * 2**20),
                         budget))

    kernel = functools.partial(encoder_kernel, zp=Zp)
    out_shape = jax.ShapeDtypeStruct((bp, 2 * Zp), jnp.float32)

    def call(weight_mode):
        wkw = {} if weight_mode is None else {"pipeline_mode": weight_mode}
        return pl.pallas_call(
            kernel,
            out_shape=out_shape,
            grid_spec=pltpu.PrefetchScalarGridSpec(
                num_scalar_prefetch=0,
                grid=grid,
                in_specs=[
                    # x tiles: software-pipelined over the batch grid.
                    # TODO(synk): bump to pl.Buffered(3) if a profile shows
                    # exposed x DMA at tile boundaries (small D/Hp, large tb).
                    pl.BlockSpec((tb, D), lambda i: (i, 0)),
                    # Weights/biases: constant index_map -> VMEM-resident;
                    # single-buffered so they don't pay 2x VMEM.
                    pl.BlockSpec((D, Hp), lambda i: (0, 0), **wkw),
                    pl.BlockSpec((1, Hp), lambda i: (0, 0), **wkw),
                    pl.BlockSpec((Hp, 2 * Zp), lambda i: (0, 0), **wkw),
                    pl.BlockSpec((1, 2 * Zp), lambda i: (0, 0), **wkw),
                ],
                out_specs=pl.BlockSpec((tb, 2 * Zp), lambda i: (i, 0)),
            ),
            compiler_params=pltpu.CompilerParams(
                dimension_semantics=("parallel",),   # megacore-shard batch (v7x)
                vmem_limit_bytes=vmem_limit,
            ),
        )(x_c, w1, b1, wh, bh)

    try:
        out = call(pl.Buffered(1))
    except Exception:
        # Fallback if single-buffering / pipeline_mode is unsupported here.
        out = call(None)

    # TODO(synk): if D*Hp weights approach the VMEM budget (esp. v7x 64 MiB),
    # add an "arbitrary" K grid axis over D with a VMEM f32 accumulator
    # instead of keeping the full (D, Hp) weight resident.
    z_mu = out[:B, :Z]
    z_var = out[:B, Zp:Zp + Z]
    return z_mu, z_var


def init_params(key, input_dim, hidden_dim, z_dim):
    ks = jax.random.split(key, 6)

    def lin(kw, kb, fan_in, fan_out):
        bound = 1.0 / jnp.sqrt(fan_in)
        w = jax.random.uniform(kw, (fan_in, fan_out), jnp.float32, -bound, bound)
        b = jax.random.uniform(kb, (1, fan_out), jnp.float32, -bound, bound)
        return w, b

    w1, b1 = lin(ks[0], ks[1], input_dim, hidden_dim)
    wmu, bmu = lin(ks[2], ks[3], hidden_dim, z_dim)
    wvar, bvar = lin(ks[4], ks[5], hidden_dim, z_dim)
    return (w1, b1, wmu, bmu, wvar, bvar)


def encoder_ref(x, params):
    w1, b1, wmu, bmu, wvar, bvar = params
    hidden = jnp.maximum(x @ w1 + b1, 0.0)
    z_mu = hidden @ wmu + bmu
    z_mu = z_mu / jnp.linalg.norm(z_mu, axis=1, keepdims=True)
    z_var = hidden @ wvar + bvar + 1.0
    return z_mu, z_var


if __name__ == "__main__":
    # Small shapes consistent with the module; batch chosen to exercise the
    # batch grid (3 tiles with block_b=16) and the row-padding path (40 -> 48).
    batch, input_dim, hidden_dim, z_dim = 40, 64, 32, 16

    key = jax.random.PRNGKey(0)
    kx, kp = jax.random.split(key)
    x = jax.random.normal(kx, (batch, input_dim), jnp.float32)
    params = init_params(kp, input_dim, hidden_dim, z_dim)
    z_mu_ref, z_var_ref = encoder_ref(x, params)

    # f32 path: tight numerical check (small block_b only to exercise the grid;
    # production default is block_b=1024 with generation-aware VMEM sizing).
    prep_f32 = prepare_params(params, compute_dtype=jnp.float32)
    z_mu, z_var = encoder_forward(x, prep_f32, block_b=16)
    jax.block_until_ready((z_mu, z_var))
    assert z_mu.shape == (batch, z_dim) and z_var.shape == (batch, z_dim)
    assert jnp.allclose(z_mu, z_mu_ref, atol=1e-5, rtol=1e-5)
    assert jnp.allclose(z_var, z_var_ref, atol=1e-5, rtol=1e-5)

    # bf16 path (production default: halves x/weight HBM traffic, f32 accum);
    # looser tolerance for bf16 rounding of inputs/weights.
    prep_bf16 = prepare_params(params)  # compute_dtype=jnp.bfloat16
    z_mu_b, z_var_b = encoder_forward(x, prep_bf16, block_b=16)
    jax.block_until_ready((z_mu_b, z_var_b))
    assert jnp.allclose(z_mu_b, z_mu_ref, atol=2e-2, rtol=2e-2)
    assert jnp.allclose(z_var_b, z_var_ref, atol=2e-2, rtol=2e-2)

    print("KERNEL_OK")
</pallas_src>

<mosaic_0001>
module attributes {stable_mosaic.version = 11 : i64} {
  func.func @encoder_kernel(%arg0: i32, %arg1: memref<16x64xf32, #tpu.memory_space<vmem>>, %arg2: memref<64x128xf32, #tpu.memory_space<vmem>>, %arg3: memref<1x128xf32, #tpu.memory_space<vmem>>, %arg4: memref<128x256xf32, #tpu.memory_space<vmem>>, %arg5: memref<1x256xf32, #tpu.memory_space<vmem>>, %arg6: memref<16x256xf32, #tpu.memory_space<vmem>>) attributes {dimension_semantics = [#tpu.dimension_semantics<parallel>], iteration_bounds = array<i64: 3>, scalar_prefetch = 0 : i64, scratch_operands = 0 : i64, tpu.core_type = #tpu.core_type<tc>, window_params = [{transform_indices = @transform_0, window_bounds = array<i64: 16, 64>}, {pipeline_mode = #tpu.pipeline_mode<synchronous>, transform_indices = @transform_1, window_bounds = array<i64: 64, 128>}, {pipeline_mode = #tpu.pipeline_mode<synchronous>, transform_indices = @transform_2, window_bounds = array<i64: 1, 128>}, {pipeline_mode = #tpu.pipeline_mode<synchronous>, transform_indices = @transform_3, window_bounds = array<i64: 128, 256>}, {pipeline_mode = #tpu.pipeline_mode<synchronous>, transform_indices = @transform_4, window_bounds = array<i64: 1, 256>}, {transform_indices = @transform_5, window_bounds = array<i64: 16, 256>}]} {
    %c0 = arith.constant 0 : index
    %c0_0 = arith.constant 0 : index
    %0 = vector.load %arg1[%c0, %c0_0] : memref<16x64xf32, #tpu.memory_space<vmem>>, vector<16x64xf32>
    %c0_1 = arith.constant 0 : index
    %c0_2 = arith.constant 0 : index
    %1 = vector.load %arg2[%c0_1, %c0_2] : memref<64x128xf32, #tpu.memory_space<vmem>>, vector<64x128xf32>
    %cst = arith.constant dense<0.000000e+00> : vector<16x128xf32>
    %2 = tpu.matmul %0, %1, %cst {dimension_numbers = #tpu.dot_dimension_numbers<[1], [0], [0], [1], [0, 0, 1, 1], [], []>} : vector<16x64xf32>, vector<64x128xf32>, vector<16x128xf32> -> vector<16x128xf32>
    %c0_3 = arith.constant 0 : index
    %c0_4 = arith.constant 0 : index
    %3 = vector.load %arg3[%c0_3, %c0_4] : memref<1x128xf32, #tpu.memory_space<vmem>>, vector<1x128xf32>
    %4 = vector.broadcast %3 : vector<1x128xf32> to vector<16x128xf32>
    %5 = arith.addf %2, %4 : vector<16x128xf32>
    %cst_5 = arith.constant 0.000000e+00 : f32
    %6 = vector.broadcast %cst_5 : f32 to vector<16x128xf32>
    %7 = arith.maximumf %5, %6 : vector<16x128xf32>
    %c0_6 = arith.constant 0 : index
    %c0_7 = arith.constant 0 : index
    %8 = vector.load %arg4[%c0_6, %c0_7] : memref<128x256xf32, #tpu.memory_space<vmem>>, vector<128x256xf32>
    %cst_8 = arith.constant dense<0.000000e+00> : vector<16x256xf32>
    %9 = tpu.matmul %7, %8, %cst_8 {dimension_numbers = #tpu.dot_dimension_numbers<[1], [0], [0], [1], [0, 0, 1, 1], [], []>} : vector<16x128xf32>, vector<128x256xf32>, vector<16x256xf32> -> vector<16x256xf32>
    %c0_9 = arith.constant 0 : index
    %c0_10 = arith.constant 0 : index
    %10 = vector.load %arg5[%c0_9, %c0_10] : memref<1x256xf32, #tpu.memory_space<vmem>>, vector<1x256xf32>
    %11 = vector.broadcast %10 : vector<1x256xf32> to vector<16x256xf32>
    %12 = arith.addf %9, %11 : vector<16x256xf32>
    %13 = vector.extract_strided_slice %12 {offsets = [0, 0], sizes = [16, 128], strides = [1, 1]} : vector<16x256xf32> to vector<16x128xf32>
    %14 = vector.extract_strided_slice %12 {offsets = [0, 128], sizes = [16, 128], strides = [1, 1]} : vector<16x256xf32> to vector<16x128xf32>
    %15 = arith.mulf %13, %13 : vector<16x128xf32>
    %cst_11 = arith.constant dense<0.000000e+00> : vector<16xf32>
    %16 = vector.multi_reduction <add>, %15, %cst_11 [1] : vector<16x128xf32> to vector<16xf32>
    %17 = vector.shape_cast %16 : vector<16xf32> to vector<16x1xf32>
    %18 = math.rsqrt %17 : vector<16x1xf32>
    %19 = vector.broadcast %18 : vector<16x1xf32> to vector<16x128xf32>
    %20 = arith.mulf %13, %19 : vector<16x128xf32>
    %c0_12 = arith.constant 0 : index
    %c0_13 = arith.constant 0 : index
    %21 = vector.load %arg6[%c0_12, %c0_13] : memref<16x256xf32, #tpu.memory_space<vmem>>, vector<16x128xf32>
    tpu.vector_store %arg6[%c0_12, %c0_13], %20 {strides = array<i32>} : memref<16x256xf32, #tpu.memory_space<vmem>>, vector<16x128xf32>,
    %cst_14 = arith.constant 1.000000e+00 : f32
    %22 = vector.broadcast %cst_14 : f32 to vector<16x128xf32>
    %23 = arith.addf %14, %22 : vector<16x128xf32>
    %c0_15 = arith.constant 0 : index
    %c128 = arith.constant 128 : index
    %24 = vector.load %arg6[%c0_15, %c128] : memref<16x256xf32, #tpu.memory_space<vmem>>, vector<16x128xf32>
    tpu.vector_store %arg6[%c0_15, %c128], %23 {strides = array<i32>} : memref<16x256xf32, #tpu.memory_space<vmem>>, vector<16x128xf32>,
    return
  }
  func.func @transform_0(%arg0: i32) -> (i32, i32) {
    %c0_i32 = arith.constant 0 : i32
    %c0_i32_0 = arith.constant 0 : i32
    return %arg0, %c0_i32 : i32, i32
  }
  func.func @transform_1(%arg0: i32) -> (i32, i32) {
    %c0_i32 = arith.constant 0 : i32
    %c0_i32_0 = arith.constant 0 : i32
    %c0_i32_1 = arith.constant 0 : i32
    return %c0_i32, %c0_i32_0 : i32, i32
  }
  func.func @transform_2(%arg0: i32) -> (i32, i32) {
    %c0_i32 = arith.constant 0 : i32
    %c0_i32_0 = arith.constant 0 : i32
    %c0_i32_1 = arith.constant 0 : i32
    return %c0_i32, %c0_i32_0 : i32, i32
  }
  func.func @transform_3(%arg0: i32) -> (i32, i32) {
    %c0_i32 = arith.constant 0 : i32
    %c0_i32_0 = arith.constant 0 : i32
    %c0_i32_1 = arith.constant 0 : i32
    return %c0_i32, %c0_i32_0 : i32, i32
  }
  func.func @transform_4(%arg0: i32) -> (i32, i32) {
    %c0_i32 = arith.constant 0 : i32
    %c0_i32_0 = arith.constant 0 : i32
    %c0_i32_1 = arith.constant 0 : i32
    return %c0_i32, %c0_i32_0 : i32, i32
  }
  func.func @transform_5(%arg0: i32) -> (i32, i32) {
    %c0_i32 = arith.constant 0 : i32
    %c0_i32_0 = arith.constant 0 : i32
    return %arg0, %c0_i32 : i32, i32
  }
}

module attributes {stable_mosaic.version = 11 : i64} {
  func.func @encoder_kernel(%arg0: i32, %arg1: memref<16x64xf32, #tpu.memory_space<vmem>>, %arg2: memref<64x128xf32, #tpu.memory_space<vmem>>, %arg3: memref<1x128xf32, #tpu.memory_space<vmem>>, %arg4: memref<128x256xf32, #tpu.memory_space<vmem>>, %arg5: memref<1x256xf32, #tpu.memory_space<vmem>>, %arg6: memref<16x256xf32, #tpu.memory_space<vmem>>) attributes {dimension_semantics = [#tpu.dimension_semantics<parallel>], iteration_bounds = array<i64: 3>, scalar_prefetch = 0 : i64, scratch_operands = 0 : i64, tpu.core_type = #tpu.core_type<tc>, window_params = [{transform_indices = @transform_0, window_bounds = array<i64: 16, 64>}, {pipeline_mode = #tpu.pipeline_mode<synchronous>, transform_indices = @transform_1, window_bounds = array<i64: 64, 128>}, {pipeline_mode = #tpu.pipeline_mode<synchronous>, transform_indices = @transform_2, window_bounds = array<i64: 1, 128>}, {pipeline_mode = #tpu.pipeline_mode<synchronous>, transform_indices = @transform_3, window_bounds = array<i64: 128, 256>}, {pipeline_mode = #tpu.pipeline_mode<synchronous>, transform_indices = @transform_4, window_bounds = array<i64: 1, 256>}, {transform_indices = @transform_5, window_bounds = array<i64: 16, 256>}]} {
    %c0 = arith.constant 0 : index
    %c0_0 = arith.constant 0 : index
    %0 = vector.load %arg1[%c0, %c0_0] : memref<16x64xf32, #tpu.memory_space<vmem>>, vector<16x64xf32>
    %c0_1 = arith.constant 0 : index
    %c0_2 = arith.constant 0 : index
    %1 = vector.load %arg2[%c0_1, %c0_2] : memref<64x128xf32, #tpu.memory_space<vmem>>, vector<64x128xf32>
    %cst = arith.constant dense<0.000000e+00> : vector<16x128xf32>
    %2 = tpu.matmul %0, %1, %cst {dimension_numbers = #tpu.dot_dimension_numbers<[1], [0], [0], [1], [0, 0, 1, 1], [], []>} : vector<16x64xf32>, vector<64x128xf32>, vector<16x128xf32> -> vector<16x128xf32>
    %c0_3 = arith.constant 0 : index
    %c0_4 = arith.constant 0 : index
    %3 = vector.load %arg3[%c0_3, %c0_4] : memref<1x128xf32, #tpu.memory_space<vmem>>, vector<1x128xf32>
    %4 = vector.broadcast %3 : vector<1x128xf32> to vector<16x128xf32>
    %5 = arith.addf %2, %4 : vector<16x128xf32>
    %cst_5 = arith.constant 0.000000e+00 : f32
    %6 = vector.broadcast %cst_5 : f32 to vector<16x128xf32>
    %7 = arith.maximumf %5, %6 : vector<16x128xf32>
    %c0_6 = arith.constant 0 : index
    %c0_7 = arith.constant 0 : index
    %8 = vector.load %arg4[%c0_6, %c0_7] : memref<128x256xf32, #tpu.memory_space<vmem>>, vector<128x256xf32>
    %cst_8 = arith.constant dense<0.000000e+00> : vector<16x256xf32>
    %9 = tpu.matmul %7, %8, %cst_8 {dimension_numbers = #tpu.dot_dimension_numbers<[1], [0], [0], [1], [0, 0, 1, 1], [], []>} : vector<16x128xf32>, vector<128x256xf32>, vector<16x256xf32> -> vector<16x256xf32>
    %c0_9 = arith.constant 0 : index
    %c0_10 = arith.constant 0 : index
    %10 = vector.load %arg5[%c0_9, %c0_10] : memref<1x256xf32, #tpu.memory_space<vmem>>, vector<1x256xf32>
    %11 = vector.broadcast %10 : vector<1x256xf32> to vector<16x256xf32>
    %12 = arith.addf %9, %11 : vector<16x256xf32>
    %13 = vector.extract_strided_slice %12 {offsets = [0, 0], sizes = [16, 128], strides = [1, 1]} : vector<16x256xf32> to vector<16x128xf32>
    %14 = vector.extract_strided_slice %12 {offsets = [0, 128], sizes = [16, 128], strides = [1, 1]} : vector<16x256xf32> to vector<16x128xf32>
    %15 = arith.mulf %13, %13 : vector<16x128xf32>
    %cst_11 = arith.constant dense<0.000000e+00> : vector<16xf32>
    %16 = vector.multi_reduction <add>, %15, %cst_11 [1] : vector<16x128xf32> to vector<16xf32>
    %17 = vector.shape_cast %16 : vector<16xf32> to vector<16x1xf32>
    %18 = math.rsqrt %17 : vector<16x1xf32>
    %19 = vector.broadcast %18 : vector<16x1xf32> to vector<16x128xf32>
    %20 = arith.mulf %13, %19 : vector<16x128xf32>
    %c0_12 = arith.constant 0 : index
    %c0_13 = arith.constant 0 : index
    %21 = vector.load %arg6[%c0_12, %c0_13] : memref<16x256xf32, #tpu.memory_space<vmem>>, vector<16x128xf32>
    tpu.vector_store %arg6[%c0_12, %c0_13], %20 {strides = array<i32>} : memref<16x256xf32, #tpu.memory_space<vmem>>, vector<16x128xf32>,
    %cst_14 = arith.constant 1.000000e+00 : f32
    %22 = vector.broadcast %cst_14 : f32 to vector<16x128xf32>
    %23 = arith.addf %14, %22 : vector<16x128xf32>
    %c0_15 = arith.constant 0 : index
    %c128 = arith.constant 128 : index
    %24 = vector.load %arg6[%c0_15, %c128] : memref<16x256xf32, #tpu.memory_space<vmem>>, vector<16x128xf32>
    tpu.vector_store %arg6[%c0_15, %c128], %23 {strides = array<i32>} : memref<16x256xf32, #tpu.memory_space<vmem>>, vector<16x128xf32>,
    return
  }
  func.func @transform_0(%arg0: i32) -> (i32, i32) {
    %c0_i32 = arith.constant 0 : i32
    %c0_i32_0 = arith.constant 0 : i32
    return %arg0, %c0_i32 : i32, i32
  }
  func.func @transform_1(%arg0: i32) -> (i32, i32) {
    %c0_i32 = arith.constant 0 : i32
    %c0_i32_0 = arith.constant 0 : i32
    %c0_i32_1 = arith.constant 0 : i32
    return %c0_i32, %c0_i32_0 : i32, i32
  }
  func.func @transform_2(%arg0: i32) -> (i32, i32) {
    %c0_i32 = arith.constant 0 : i32
    %c0_i32_0 = arith.constant 0 : i32
    %c0_i32_1 = arith.constant 0 : i32
    return %c0_i32, %c0_i32_0 : i32, i32
  }
  func.func @transform_3(%arg0: i32) -> (i32, i32) {
    %c0_i32 = arith.constant 0 : i32
    %c0_i32_0 = arith.constant 0 : i32
    %c0_i32_1 = arith.constant 0 : i32
    return %c0_i32, %c0_i32_0 : i32, i32
  }
  func.func @transform_4(%arg0: i32) -> (i32, i32) {
    %c0_i32 = arith.constant 0 : i32
    %c0_i32_0 = arith.constant 0 : i32
    %c0_i32_1 = arith.constant 0 : i32
    return %c0_i32, %c0_i32_0 : i32, i32
  }
  func.func @transform_5(%arg0: i32) -> (i32, i32) {
    %c0_i32 = arith.constant 0 : i32
    %c0_i32_0 = arith.constant 0 : i32
    return %arg0, %c0_i32 : i32, i32
  }
}

</mosaic_0001>

<llo_original>
// kernel: tpu_custom_call.1
$region0: #{tpu_custom_call.1}
  #allocation0 [shape = 'u32[]', space=smem, size = 0x4, offset = 0x4, fixed_abs, tag = 'smem constant byte address 0x4 - core index']
  #allocation1 [shape = 'u32[72,128]{1,0:T(1,128)}', space=vmem, size = 0x9000, scoped, tag = 'internal scratch']
  %s0 = inlined_call_operand.hbm [shape: f32[48,64], index: 0, kind: input, shape index: {}]
  %s1 = inlined_call_operand.hbm [shape: f32[64,128], index: 1, kind: input, shape index: {}]
  %s2 = inlined_call_operand.vmem [shape: f32[1,128], index: 2, kind: input, shape index: {}]
  %s3 = inlined_call_operand.hbm [shape: f32[128,256], index: 3, kind: input, shape index: {}]
  %s4 = inlined_call_operand.vmem [shape: f32[1,256], index: 4, kind: input, shape index: {}]
  %s5 = inlined_call_operand.hbm [shape: f32[48,256], index: 5, kind: output, shape index: {}]
  %s6 = sld [smem:[#allocation0]]
  $region65: #{tpu_custom_call.1} parent=0
    _
  %s8 = ssub.s32 1, %s6
  %s9 = scalar_select 0, %s8, %s6
  $region1: #{tpu_custom_call.1} parent=0
    #allocation2 [shape = 'u8[16384]{0}', space=vmem, size = 0x4000, scoped, tag = 'input window, operand 0']
    #allocation3 [shape = 's32[2]{0}', space=sflag, size = 0x8, scoped, tag = 'scoped memory for tpu_custom_call.1']
    #allocation4 [shape = 's32[2]{0}', space=sflag, size = 0x8, scoped, tag = 'scoped memory for tpu_custom_call.1']
    #allocation5 [shape = 'u8[32768]{0}', space=vmem, size = 0x8000, scoped, tag = 'input window, operand 1, single buffered']
    #allocation6 [shape = 's32[1]{0}', space=sflag, size = 0x4, scoped, tag = 'scoped memory for tpu_custom_call.1']
    #allocation7 [shape = 'u8[131072]{0}', space=vmem, size = 0x20000, scoped, tag = 'input window, operand 3, single buffered']
    #allocation8 [shape = 'u8[32768]{0}', space=vmem, size = 0x8000, scoped, tag = 'output window, operand 0']
    %10 = vsyncpa [#allocation3], 0
    %s11 = scalar_lea.sflag [#allocation3], 1
    %12 = vsyncpa %s11, 0
    %13 = vsyncpa [#allocation6], 0
    %14 = vsyncpa [#allocation4], 0
    %s15 = scalar_lea.sflag [#allocation4], 1
    %16 = vsyncpa %s15, 0
    loop: start=0, step=1, limit=5
    $region2: #{tpu_custom_call.1} parent=1 // loop_pre_header
      _
    $region3: #{tpu_custom_call.1} parent=1 // loop_header
      %s18 = sphi 0, %s22
      %p19 = scmp.ge.s32.totalorder %s18, 5
      %s28 = sphi 0, %s30
      %s31 = sphi 0, %s28
      %s32 = sphi 0, %s31
      %s48 = sphi 0, %s32
      %s52 = sphi 0, %s52
      %s54 = sphi 0, %s52
      %s55 = sphi 0, %s54
      %s69 = sphi 0, %s55
      %s73 = sphi 0, %s73
      %s75 = sphi 0, %s73
      %s76 = sphi 0, %s75
      %s90 = sphi 0, %s76
      %s94 = sphi 0, %s94
      %s96 = sphi 0, %s94
      %s97 = sphi 0, %s96
      %s111 = sphi 0, %s97
      %s115 = sphi 0, %s115
      %s117 = sphi 0, %s115
      %s118 = sphi 0, %s117
      %s132 = sphi 0, %s118
      %s138 = sphi 0, %s140
      %s141 = sphi 0, %s138
      %s142 = sphi 0, %s141
      %s158 = sphi 0, %s142
    $region4: #{tpu_custom_call.1} parent=1 // loop_header_branch
      %21 = sbr.rel (%p19) target = $region8
    $region5: #{tpu_custom_call.1} parent=1 // loop_body
      %s23 = ssub.s32 %s18, 1
      %s24 = ssub.s32 %s18, 2
      %s25 = sadd.s32 %s18, 1
      %s26 = ssub.s32 %s18, %s25
      %p27 = scmp.eq.s32.totalorder %s26, 0
      %s29 = sadd.s32 %s28, 1
      %s30 = scalar_select %p27, %s28, %s29
      %p33 = pneg %p27
      %p34 = scmp.eq.s32.totalorder %s18, 2
      %p35 = por %p33, %p34
      %p36 = scmp.ne.s32.totalorder %s28, %s31
      %p37 = scmp.eq.s32.totalorder %s18, 0
      %p38 = por %p36, %p37
      %p39 = scmp.ne.s32.totalorder %s28, %s31
      %p40 = scmp.eq.s32.totalorder %s23, 2
      %p41 = por %p39, %p40
      %p42 = scmp.ne.s32.totalorder %s31, %s32
      %p43 = scmp.eq.s32.totalorder %s23, 0
      %p44 = por %p42, %p43
      %p45 = scmp.ne.s32.totalorder %s31, %s32
      %p46 = scmp.eq.s32.totalorder %s24, 2
      %p47 = por %p45, %p46
      %p49 = scmp.ne.s32.totalorder %s32, %s48
      %p50 = scmp.eq.s32.totalorder %s24, 0
      %p51 = por %p49, %p50
      %s53 = sadd.s32 %s52, 1
      %p56 = scmp.eq.s32.totalorder %s18, 2
      %p57 = scmp.ne.s32.totalorder %s52, %s54
      %p58 = scmp.eq.s32.totalorder %s18, 0
      %p59 = por %p57, %p58
      %p60 = scmp.ne.s32.totalorder %s52, %s54
      %p61 = scmp.eq.s32.totalorder %s23, 2
      %p62 = por %p60, %p61
      %p63 = scmp.ne.s32.totalorder %s54, %s55
      %p64 = scmp.eq.s32.totalorder %s23, 0
      %p65 = por %p63, %p64
      %p66 = scmp.ne.s32.totalorder %s54, %s55
      %p67 = scmp.eq.s32.totalorder %s24, 2
      %p68 = por %p66, %p67
      %p70 = scmp.ne.s32.totalorder %s55, %s69
      %p71 = scmp.eq.s32.totalorder %s24, 0
      %p72 = por %p70, %p71
      %s74 = sadd.s32 %s73, 1
      %p77 = scmp.eq.s32.totalorder %s18, 2
      %p78 = scmp.ne.s32.totalorder %s73, %s75
      %p79 = scmp.eq.s32.totalorder %s18, 0
      %p80 = por %p78, %p79
      %p81 = scmp.ne.s32.totalorder %s73, %s75
      %p82 = scmp.eq.s32.totalorder %s23, 2
      %p83 = por %p81, %p82
      %p84 = scmp.ne.s32.totalorder %s75, %s76
      %p85 = scmp.eq.s32.totalorder %s23, 0
      %p86 = por %p84, %p85
      %p87 = scmp.ne.s32.totalorder %s75, %s76
      %p88 = scmp.eq.s32.totalorder %s24, 2
      %p89 = por %p87, %p88
      %p91 = scmp.ne.s32.totalorder %s76, %s90
      %p92 = scmp.eq.s32.totalorder %s24, 0
      %p93 = por %p91, %p92
      %s95 = sadd.s32 %s94, 1
      %p98 = scmp.eq.s32.totalorder %s18, 2
      %p99 = scmp.ne.s32.totalorder %s94, %s96
      %p100 = scmp.eq.s32.totalorder %s18, 0
      %p101 = por %p99, %p100
      %p102 = scmp.ne.s32.totalorder %s94, %s96
      %p103 = scmp.eq.s32.totalorder %s23, 2
      %p104 = por %p102, %p103
      %p105 = scmp.ne.s32.totalorder %s96, %s97
      %p106 = scmp.eq.s32.totalorder %s23, 0
      %p107 = por %p105, %p106
      %p108 = scmp.ne.s32.totalorder %s96, %s97
      %p109 = scmp.eq.s32.totalorder %s24, 2
      %p110 = por %p108, %p109
      %p112 = scmp.ne.s32.totalorder %s97, %s111
      %p113 = scmp.eq.s32.totalorder %s24, 0
      %p114 = por %p112, %p113
      %s116 = sadd.s32 %s115, 1
      %p119 = scmp.eq.s32.totalorder %s18, 2
      %p120 = scmp.ne.s32.totalorder %s115, %s117
      %p121 = scmp.eq.s32.totalorder %s18, 0
      %p122 = por %p120, %p121
      %p123 = scmp.ne.s32.totalorder %s115, %s117
      %p124 = scmp.eq.s32.totalorder %s23, 2
      %p125 = por %p123, %p124
      %p126 = scmp.ne.s32.totalorder %s117, %s118
      %p127 = scmp.eq.s32.totalorder %s23, 0
      %p128 = por %p126, %p127
      %p129 = scmp.ne.s32.totalorder %s117, %s118
      %p130 = scmp.eq.s32.totalorder %s24, 2
      %p131 = por %p129, %p130
      %p133 = scmp.ne.s32.totalorder %s118, %s132
      %p134 = scmp.eq.s32.totalorder %s24, 0
      %p135 = por %p133, %p134
      %s136 = ssub.s32 %s18, %s25
      %p137 = scmp.eq.s32.totalorder %s136, 0
      %s139 = sadd.s32 %s138, 1
      %s140 = scalar_select %p137, %s138, %s139
      %p143 = pneg %p137
      %p144 = scmp.eq.s32.totalorder %s18, 2
      %p145 = por %p143, %p144
      %p146 = scmp.ne.s32.totalorder %s138, %s141
      %p147 = scmp.eq.s32.totalorder %s18, 0
      %p148 = por %p146, %p147
      %p149 = scmp.ne.s32.totalorder %s138, %s141
      %p150 = scmp.eq.s32.totalorder %s23, 2
      %p151 = por %p149, %p150
      %p152 = scmp.ne.s32.totalorder %s141, %s142
      %p153 = scmp.eq.s32.totalorder %s23, 0
      %p154 = por %p152, %p153
      %p155 = scmp.ne.s32.totalorder %s141, %s142
      %p156 = scmp.eq.s32.totalorder %s24, 2
      %p157 = por %p155, %p156
      %p159 = scmp.ne.s32.totalorder %s142, %s158
      %p160 = scmp.eq.s32.totalorder %s24, 0
      %p161 = por %p159, %p160
      %p162 = scmp.le.s32.totalorder 1, %s18
      %p163 = scmp.lt.s32.totalorder %s18, 4
      %p164 = pnand %p162, %p163
      %p165 = pneg %p164
      // Predicated region
      $region9: #{tpu_custom_call.1} parent=5 // pred_check
        _
      $region10: #{tpu_custom_call.1} parent=5 // pred_check_branch
        %167 = sbr.rel (%p164) target = $region12
      $region11: #{tpu_custom_call.1} parent=5 // pred_region
        %s168 = ssub.s32 %s18, 1
        // Predicated region
        $region13: #{tpu_custom_call.1} parent=11 // pred_check
          %p169 = pneg %p65
        $region14: #{tpu_custom_call.1} parent=11 // pred_check_branch
          %171 = sbr.rel (%p169) target = $region16
        $region15: #{tpu_custom_call.1} parent=11 // pred_region
          %173 = vsyncadd [#allocation6], 0
          %s174 = sshll.u32 %s1, 4
          %s175 = int_to_ptr.hbm [resolvable:$true] %s174
          %s176 = sshll.u32 [#allocation5], 4
          %s177 = int_to_ptr.vmem [resolvable:$true] %s176
          %182 = dma.hbm_to_vmem [thread:$0]  %s175, 1024, %s177, [#allocation6], 128, 128, 8
        $region16: #{tpu_custom_call.1} parent=11 // pred_fallthru
          _
        // Predicated region
        $region17: #{tpu_custom_call.1} parent=11 // pred_check
          %p183 = pneg %p86
        $region18: #{tpu_custom_call.1} parent=11 // pred_check_branch
          %185 = sbr.rel (%p183) target = $region20
        $region19: #{tpu_custom_call.1} parent=11 // pred_region
          _
        $region20: #{tpu_custom_call.1} parent=11 // pred_fallthru
          _
        // Predicated region
        $region21: #{tpu_custom_call.1} parent=11 // pred_check
          %p186 = pneg %p107
        $region22: #{tpu_custom_call.1} parent=11 // pred_check_branch
          %188 = sbr.rel (%p186) target = $region24
        $region23: #{tpu_custom_call.1} parent=11 // pred_region
          %190 = vsyncadd [#allocation6], 0
          %s191 = sshll.u32 %s3, 4
          %s192 = int_to_ptr.hbm [resolvable:$true] %s191
          %s193 = sshll.u32 [#allocation7], 4
          %s194 = int_to_ptr.vmem [resolvable:$true] %s193
          %199 = dma.hbm_to_vmem [thread:$0]  %s192, 4096, %s194, [#allocation6], 256, 256, 16
        $region24: #{tpu_custom_call.1} parent=11 // pred_fallthru
          _
        // Predicated region
        $region25: #{tpu_custom_call.1} parent=11 // pred_check
          %p200 = pneg %p128
        $region26: #{tpu_custom_call.1} parent=11 // pred_check_branch
          %202 = sbr.rel (%p200) target = $region28
        $region27: #{tpu_custom_call.1} parent=11 // pred_region
          _
        $region28: #{tpu_custom_call.1} parent=11 // pred_fallthru
          _
      $region12: #{tpu_custom_call.1} parent=5 // pred_fallthru
        _
      %p203 = scmp.lt.s32.totalorder %s18, 3
      // Predicated region
      $region29: #{tpu_custom_call.1} parent=5 // pred_check
        %p204 = pneg %p203
      $region30: #{tpu_custom_call.1} parent=5 // pred_check_branch
        %206 = sbr.rel (%p204) target = $region32
      $region31: #{tpu_custom_call.1} parent=5 // pred_region
        // Predicated region
        $region33: #{tpu_custom_call.1} parent=31 // pred_check
          %p207 = pneg %p38
        $region34: #{tpu_custom_call.1} parent=31 // pred_check_branch
          %209 = sbr.rel (%p207) target = $region36
        $region35: #{tpu_custom_call.1} parent=31 // pred_region
          %s210 = sand.u32 %s28, 1
          %s211 = scalar_lea.sflag [#allocation3], %s210
          %s212 = sand.u32 %s28, 1
          %s213 = smul.addr %s212, 16
          %s214 = scalar_lea.vmem [#allocation2], %s213
          %s215 = smul.u32 2, %s18
          %217 = vsyncadd %s211, 0
          %s218 = smul.addr %s215, 8
          %s219 = scalar_lea.hbm %s0, %s218
          %s220 = sshll.u32 %s219, 4
          %s221 = int_to_ptr.hbm [resolvable:$true] %s220
          %s222 = sshll.u32 %s214, 4
          %s223 = int_to_ptr.vmem [resolvable:$true] %s222
          %228 = dma.hbm_to_vmem [thread:$0]  %s221, 256, %s223, %s211, 128, 128, 8
        $region36: #{tpu_custom_call.1} parent=31 // pred_fallthru
          _
      $region32: #{tpu_custom_call.1} parent=5 // pred_fallthru
        _
      %p229 = scmp.le.s32.totalorder 1, %s18
      %p230 = scmp.lt.s32.totalorder %s18, 4
      %p231 = pnand %p229, %p230
      %p232 = pneg %p231
      // Predicated region
      $region37: #{tpu_custom_call.1} parent=5 // pred_check
        _
      $region38: #{tpu_custom_call.1} parent=5 // pred_check_branch
        %234 = sbr.rel (%p231) target = $region40
      $region39: #{tpu_custom_call.1} parent=5 // pred_region
        %s235 = ssub.s32 %s18, 1
        %s236 = sand.u32 %s31, 1
        %s237 = scalar_lea.sflag [#allocation3], %s236
        %s238 = sand.u32 %s31, 1
        %s239 = smul.addr %s238, 16
        %s240 = scalar_lea.vmem [#allocation2], %s239
        // Predicated region
        $region41: #{tpu_custom_call.1} parent=39 // pred_check
          %p241 = pneg %p44
        $region42: #{tpu_custom_call.1} parent=39 // pred_check_branch
          %243 = sbr.rel (%p241) target = $region44
        $region43: #{tpu_custom_call.1} parent=39 // pred_region
          %245 = dma.done %s237, 256
        $region44: #{tpu_custom_call.1} parent=39 // pred_fallthru
          _
        // Predicated region
        $region45: #{tpu_custom_call.1} parent=39 // pred_check
          %p246 = pneg %p65
        $region46: #{tpu_custom_call.1} parent=39 // pred_check_branch
          %248 = sbr.rel (%p246) target = $region48
        $region47: #{tpu_custom_call.1} parent=39 // pred_region
          %250 = dma.done [#allocation6], 1024
        $region48: #{tpu_custom_call.1} parent=39 // pred_fallthru
          _
        // Predicated region
        $region49: #{tpu_custom_call.1} parent=39 // pred_check
          %p251 = pneg %p107
        $region50: #{tpu_custom_call.1} parent=39 // pred_check_branch
          %253 = sbr.rel (%p251) target = $region52
        $region51: #{tpu_custom_call.1} parent=39 // pred_region
          %255 = dma.done [#allocation6], 4096
        $region52: #{tpu_custom_call.1} parent=39 // pred_fallthru
          _
        %s256 = sand.u32 %s31, 1
        %s257 = scalar_lea.sflag [#allocation3], %s256
        %s258 = sand.u32 %s31, 1
        %s259 = smul.addr %s258, 16
        %s260 = scalar_lea.vmem [#allocation2], %s259
        %p261 = pneg %p44
        %p262 = pneg %p41
        %p263 = pneg %p65
        %p264 = pneg %p62
        %p265 = pneg %p86
        %p266 = pneg %p83
        %p267 = pneg %p107
        %p268 = pneg %p104
        %p269 = pneg %p128
        %p270 = pneg %p125
        %p271 = pneg %p154
        %p272 = pneg %p151
        %s273 = sand.u32 %s141, 1
        %s274 = scalar_lea.sflag [#allocation4], %s273
        %s275 = sand.u32 %s141, 1
        %s276 = smul.addr %s275, 32
        %s277 = scalar_lea.vmem [#allocation8], %s276
        %s278 = smul.u32 2, %s23
        %s279 = smul.u32 2, %s23
        %v280 = vld [vmem:[%s240] sm:$0xff]
        %v281 = vld [vmem:[%s240 + $0x8] sm:$0xff]
        %v282 = vld [vmem:[#allocation5] sm:$0xff]
        %v283 = vld [vmem:[#allocation5 + $0x8] sm:$0xff]
        %v284 = vld [vmem:[#allocation5 + $0x10] sm:$0xff]
        %v285 = vld [vmem:[#allocation5 + $0x18] sm:$0xff]
        %v286 = vld [vmem:[#allocation5 + $0x20] sm:$0xff]
        %v287 = vld [vmem:[#allocation5 + $0x28] sm:$0xff]
        %v288 = vld [vmem:[#allocation5 + $0x30] sm:$0xff]
        %v289 = vld [vmem:[#allocation5 + $0x38] sm:$0xff]
        %v290 = vld [vmem:[%s2] sm:$0x1]
        %v292 = vperm.slane %v290, 0
        %vm294 = vcmask 523264
        %v296 = vsel %vm294, %v280, 0
        %v299 = vsel %vm294, %v281, 0
        %301 = vmatpush.msra.mxu0 0.0
        %302 = vmatpush.msra.mxu0 0.0
        %303 = vmatpush.msra.mxu0 0.0
        %304 = vmatpush.msra.mxu0 0.0
        %305 = vmatpush.msra.mxu0 0.0
        %306 = vmatpush.msra.mxu0 0.0
        %307 = vmatpush.msra.mxu0 0.0
        %308 = vmatpush.msra.mxu0 0.0
        %309 = vmatpush.msra.mxu0 %v289
        %310 = vmatpush.msra.mxu0 %v288
        %311 = vmatpush.msra.mxu0 %v287
        %312 = vmatpush.msra.mxu0 %v286
        %313 = vmatpush.msra.mxu0 %v285
        %314 = vmatpush.msra.mxu0 %v284
        %315 = vmatpush.msra.mxu0 %v283
        %316 = vmatpush.msra.mxu0 %v282
        %317 = vmatmul.f32.gmra.mxu0 %v296
        %v318 = vpop.f32.mrf.mxu0
        %v319 = vadd.f32 %v292, %v318
        %320 = vmatmul.f32.gmra.mxu0 %v299
        %v321 = vpop.f32.mrf.mxu0
        %v322 = vadd.f32 %v292, %v321
        %323 = vdwg.mxu0
        %v324 = vmax.f32 %v319, 0.0
        %v325 = vmax.f32 %v322, 0.0
        %v326 = vld [vmem:[#allocation7] sm:$0xff]
        %v327 = vld [vmem:[#allocation7 + $0x8] sm:$0xff]
        %v328 = vld [vmem:[#allocation7 + $0x10] sm:$0xff]
        %v329 = vld [vmem:[#allocation7 + $0x18] sm:$0xff]
        %v330 = vld [vmem:[#allocation7 + $0x20] sm:$0xff]
        %v331 = vld [vmem:[#allocation7 + $0x28] sm:$0xff]
        %v332 = vld [vmem:[#allocation7 + $0x30] sm:$0xff]
        %v333 = vld [vmem:[#allocation7 + $0x38] sm:$0xff]
        %v334 = vld [vmem:[#allocation7 + $0x40] sm:$0xff]
        %v335 = vld [vmem:[#allocation7 + $0x48] sm:$0xff]
        %v336 = vld [vmem:[#allocation7 + $0x50] sm:$0xff]
        %v337 = vld [vmem:[#allocation7 + $0x58] sm:$0xff]
        %v338 = vld [vmem:[#allocation7 + $0x60] sm:$0xff]
        %v339 = vld [vmem:[#allocation7 + $0x68] sm:$0xff]
        %v340 = vld [vmem:[#allocation7 + $0x70] sm:$0xff]
        %v341 = vld [vmem:[#allocation7 + $0x78] sm:$0xff]
        %v342 = vld [vmem:[#allocation7 + $0x80] sm:$0xff]
        %v343 = vld [vmem:[#allocation7 + $0x88] sm:$0xff]
        %v344 = vld [vmem:[#allocation7 + $0x90] sm:$0xff]
        %v345 = vld [vmem:[#allocation7 + $0x98] sm:$0xff]
        %v346 = vld [vmem:[#allocation7 + $0xa0] sm:$0xff]
        %v347 = vld [vmem:[#allocation7 + $0xa8] sm:$0xff]
        %v348 = vld [vmem:[#allocation7 + $0xb0] sm:$0xff]
        %v349 = vld [vmem:[#allocation7 + $0xb8] sm:$0xff]
        %v350 = vld [vmem:[#allocation7 + $0xc0] sm:$0xff]
        %v351 = vld [vmem:[#allocation7 + $0xc8] sm:$0xff]
        %v352 = vld [vmem:[#allocation7 + $0xd0] sm:$0xff]
        %v353 = vld [vmem:[#allocation7 + $0xd8] sm:$0xff]
        %v354 = vld [vmem:[#allocation7 + $0xe0] sm:$0xff]
        %v355 = vld [vmem:[#allocation7 + $0xe8] sm:$0xff]
        %v356 = vld [vmem:[#allocation7 + $0xf0] sm:$0xff]
        %v357 = vld [vmem:[#allocation7 + $0xf8] sm:$0xff]
        %v358 = vld [vmem:[%s4] sm:$0x3]
        %v360 = vperm.slane %v358, 0
        %v361 = vperm.slane %v358, 1
        %364 = vmatpush.msra.mxu0 %v356
        %365 = vmatpush.msra.mxu0 %v354
        %366 = vmatpush.msra.mxu0 %v352
        %367 = vmatpush.msra.mxu0 %v350
        %368 = vmatpush.msra.mxu0 %v348
        %369 = vmatpush.msra.mxu0 %v346
        %370 = vmatpush.msra.mxu0 %v344
        %371 = vmatpush.msra.mxu0 %v342
        %372 = vmatpush.msra.mxu0 %v340
        %373 = vmatpush.msra.mxu0 %v338
        %374 = vmatpush.msra.mxu0 %v336
        %375 = vmatpush.msra.mxu0 %v334
        %376 = vmatpush.msra.mxu0 %v332
        %377 = vmatpush.msra.mxu0 %v330
        %378 = vmatpush.msra.mxu0 %v328
        %379 = vmatpush.msra.mxu0 %v326
        %380 = vmatmul.f32.gmra.mxu0 %v324
        %v381 = vpop.f32.mrf.mxu0
        %v382 = vadd.f32 %v360, %v381
        %383 = vmatmul.f32.gmra.mxu0 %v325
        %v384 = vpop.f32.mrf.mxu0
        %v385 = vadd.f32 %v360, %v384
        %386 = vdwg.mxu0
        %387 = vmatpush.msra.mxu0 %v357
        %388 = vmatpush.msra.mxu0 %v355
        %389 = vmatpush.msra.mxu0 %v353
        %390 = vmatpush.msra.mxu0 %v351
        %391 = vmatpush.msra.mxu0 %v349
        %392 = vmatpush.msra.mxu0 %v347
        %393 = vmatpush.msra.mxu0 %v345
        %394 = vmatpush.msra.mxu0 %v343
        %395 = vmatpush.msra.mxu0 %v341
        %396 = vmatpush.msra.mxu0 %v339
        %397 = vmatpush.msra.mxu0 %v337
        %398 = vmatpush.msra.mxu0 %v335
        %399 = vmatpush.msra.mxu0 %v333
        %400 = vmatpush.msra.mxu0 %v331
        %401 = vmatpush.msra.mxu0 %v329
        %402 = vmatpush.msra.mxu0 %v327
        %403 = vmatmul.f32.gmra.mxu0 %v324
        %v404 = vpop.f32.mrf.mxu0
        %v405 = vadd.f32 %v361, %v404
        %406 = vmatmul.f32.gmra.mxu0 %v325
        %v407 = vpop.f32.mrf.mxu0
        %v408 = vadd.f32 %v361, %v407
        %409 = vdwg.mxu0
        %v410 = vmul.f32 %v382, %v382
        %v411 = vmul.f32 %v385, %v385
        %412 = vadd.xlane.f32.xlu0 %v410
        %v413 = vpop.xlane.xlu0 %412
        %414 = vadd.xlane.f32.xlu0 %v411
        %v415 = vpop.xlane.xlu0 %414
        %v416 = vrsqrt.pop %v413
        %v417 = vmul.f32 %v416, %v413
        %v418 = vmul.f32 %v417, %v416
        %v419 = vmul.f32 0.5, %v418
        %v420 = vsub.f32 1.5, %v419
        %v421 = vmul.f32 %v416, %v420
        %vm422 = vweird.f32 %v413
        %vm423 = vweird.f32 %v416
        %vm424 = vmor %vm422, %vm423
        %v425 = vsel %vm424, %v416, %v421
        %v426 = vrsqrt.pop %v415
        %v427 = vmul.f32 %v426, %v415
        %v428 = vmul.f32 %v427, %v426
        %v429 = vmul.f32 0.5, %v428
        %v430 = vsub.f32 1.5, %v429
        %v431 = vmul.f32 %v426, %v430
        %vm432 = vweird.f32 %v415
        %vm433 = vweird.f32 %v426
        %vm434 = vmor %vm432, %vm433
        %v435 = vsel %vm434, %v426, %v431
        %v436 = vmul.f32 %v382, %v425
        %v437 = vmul.f32 %v385, %v435
        %438 = vst [vmem:[%s277] sm:$0xff] %v436
        %439 = vst [vmem:[%s277 + $0x10] sm:$0xff] %v437
        %v440 = vadd.f32 %v405, 1.0
        %v441 = vadd.f32 %v408, 1.0
        %442 = vst [vmem:[%s277 + $0x8] sm:$0xff] %v440
        %443 = vst [vmem:[%s277 + $0x18] sm:$0xff] %v441
        %s444 = sand.u32 %s141, 1
        %s445 = scalar_lea.sflag [#allocation4], %s444
        %s446 = sand.u32 %s141, 1
        %s447 = smul.addr %s446, 32
        %s448 = scalar_lea.vmem [#allocation8], %s447
        // Predicated region
        $region53: #{tpu_custom_call.1} parent=39 // pred_check
          %p449 = pneg %p151
        $region54: #{tpu_custom_call.1} parent=39 // pred_check_branch
          %451 = sbr.rel (%p449) target = $region56
        $region55: #{tpu_custom_call.1} parent=39 // pred_region
          %s452 = smul.u32 2, %s23
          %454 = vsyncadd %s445, 0
          %s455 = smul.addr %s452, 2
          %s456 = smul.addr %s455, 8
          %s457 = scalar_lea.hbm %s5, %s456
          %s458 = sshll.u32 %s448, 4
          %s459 = int_to_ptr.vmem [resolvable:$true] %s458
          %s460 = sshll.u32 %s457, 4
          %s461 = int_to_ptr.hbm [resolvable:$true] %s460
          %466 = dma.vmem_to_hbm [thread:$0]  %s459, 512, %s461, %s445, 256, 256, 16
        $region56: #{tpu_custom_call.1} parent=39 // pred_fallthru
          _
      $region40: #{tpu_custom_call.1} parent=5 // pred_fallthru
        _
      %p467 = scmp.le.s32.totalorder 2, %s18
      // Predicated region
      $region57: #{tpu_custom_call.1} parent=5 // pred_check
        %p468 = pneg %p467
      $region58: #{tpu_custom_call.1} parent=5 // pred_check_branch
        %470 = sbr.rel (%p468) target = $region60
      $region59: #{tpu_custom_call.1} parent=5 // pred_region
        %s471 = ssub.s32 %s18, 2
        // Predicated region
        $region61: #{tpu_custom_call.1} parent=59 // pred_check
          %p472 = pneg %p157
        $region62: #{tpu_custom_call.1} parent=59 // pred_check_branch
          %474 = sbr.rel (%p472) target = $region64
        $region63: #{tpu_custom_call.1} parent=59 // pred_region
          %s475 = sand.u32 %s142, 1
          %s476 = scalar_lea.sflag [#allocation4], %s475
          %s477 = sand.u32 %s142, 1
          %s478 = smul.addr %s477, 32
          %s479 = scalar_lea.vmem [#allocation8], %s478
          %481 = dma.done %s476, 512
        $region64: #{tpu_custom_call.1} parent=59 // pred_fallthru
          _
      $region60: #{tpu_custom_call.1} parent=5 // pred_fallthru
        _
    $region6: #{tpu_custom_call.1} parent=1 // loop_footer
      %s22 = sadd.s32 1, %s18
    $region7: #{tpu_custom_call.1} parent=1 // loop_footer_branch
      %17 = sbr.rel target = $region3
    $region8: #{tpu_custom_call.1} parent=1 // loop_exit
      _
    %482 = vsyncpa [#allocation3], 1
    %s483 = scalar_lea.sflag [#allocation3], 1
    %484 = vsyncpa %s483, 1
    %485 = vsyncpa [#allocation6], 1
    %486 = vsyncpa [#allocation4], 1
    %s487 = scalar_lea.sflag [#allocation4], 1
    %488 = vsyncpa %s487, 1

// kernel: tpu_custom_call.1
$region0: #{tpu_custom_call.1}
  #allocation0 [shape = 'u32[]', space=smem, size = 0x4, offset = 0x4, fixed_abs, tag = 'smem constant byte address 0x4 - core index']
  #allocation1 [shape = 'u32[72,128]{1,0:T(1,128)}', space=vmem, size = 0x9000, scoped, tag = 'internal scratch']
  %s0 = inlined_call_operand.hbm [shape: f32[48,64], index: 0, kind: input, shape index: {}]
  %s1 = inlined_call_operand.hbm [shape: f32[64,128], index: 1, kind: input, shape index: {}]
  %s2 = inlined_call_operand.vmem [shape: f32[1,128], index: 2, kind: input, shape index: {}]
  %s3 = inlined_call_operand.hbm [shape: f32[128,256], index: 3, kind: input, shape index: {}]
  %s4 = inlined_call_operand.vmem [shape: f32[1,256], index: 4, kind: input, shape index: {}]
  %s5 = inlined_call_operand.hbm [shape: f32[48,256], index: 5, kind: output, shape index: {}]
  %s6 = sld [smem:[#allocation0]]
  $region65: #{tpu_custom_call.1} parent=0
    _
  %s8 = ssub.s32 1, %s6
  %s9 = scalar_select 0, %s8, %s6
  $region1: #{tpu_custom_call.1} parent=0
    #allocation2 [shape = 'u8[16384]{0}', space=vmem, size = 0x4000, scoped, tag = 'input window, operand 0']
    #allocation3 [shape = 's32[2]{0}', space=sflag, size = 0x8, scoped, tag = 'scoped memory for tpu_custom_call.1']
    #allocation4 [shape = 's32[2]{0}', space=sflag, size = 0x8, scoped, tag = 'scoped memory for tpu_custom_call.1']
    #allocation5 [shape = 'u8[32768]{0}', space=vmem, size = 0x8000, scoped, tag = 'input window, operand 1, single buffered']
    #allocation6 [shape = 's32[1]{0}', space=sflag, size = 0x4, scoped, tag = 'scoped memory for tpu_custom_call.1']
    #allocation7 [shape = 'u8[131072]{0}', space=vmem, size = 0x20000, scoped, tag = 'input window, operand 3, single buffered']
    #allocation8 [shape = 'u8[32768]{0}', space=vmem, size = 0x8000, scoped, tag = 'output window, operand 0']
    %10 = vsyncpa [#allocation3], 0
    %s11 = scalar_lea.sflag [#allocation3], 1
    %12 = vsyncpa %s11, 0
    %13 = vsyncpa [#allocation6], 0
    %14 = vsyncpa [#allocation4], 0
    %s15 = scalar_lea.sflag [#allocation4], 1
    %16 = vsyncpa %s15, 0
    loop: start=0, step=1, limit=5
    $region2: #{tpu_custom_call.1} parent=1 // loop_pre_header
      _
    $region3: #{tpu_custom_call.1} parent=1 // loop_header
      %s18 = sphi 0, %s22
      %p19 = scmp.ge.s32.totalorder %s18, 5
      %s28 = sphi 0, %s30
      %s31 = sphi 0, %s28
      %s32 = sphi 0, %s31
      %s48 = sphi 0, %s32
      %s52 = sphi 0, %s52
      %s54 = sphi 0, %s52
      %s55 = sphi 0, %s54
      %s69 = sphi 0, %s55
      %s73 = sphi 0, %s73
      %s75 = sphi 0, %s73
      %s76 = sphi 0, %s75
      %s90 = sphi 0, %s76
      %s94 = sphi 0, %s94
      %s96 = sphi 0, %s94
      %s97 = sphi 0, %s96
      %s111 = sphi 0, %s97
      %s115 = sphi 0, %s115
      %s117 = sphi 0, %s115
      %s118 = sphi 0, %s117
      %s132 = sphi 0, %s118
      %s138 = sphi 0, %s140
      %s141 = sphi 0, %s138
      %s142 = sphi 0, %s141
      %s158 = sphi 0, %s142
    $region4: #{tpu_custom_call.1} parent=1 // loop_header_branch
      %21 = sbr.rel (%p19) target = $region8
    $region5: #{tpu_custom_call.1} parent=1 // loop_body
      %s23 = ssub.s32 %s18, 1
      %s24 = ssub.s32 %s18, 2
      %s25 = sadd.s32 %s18, 1
      %s26 = ssub.s32 %s18, %s25
      %p27 = scmp.eq.s32.totalorder %s26, 0
      %s29 = sadd.s32 %s28, 1
      %s30 = scalar_select %p27, %s28, %s29
      %p33 = pneg %p27
      %p34 = scmp.eq.s32.totalorder %s18, 2
      %p35 = por %p33, %p34
      %p36 = scmp.ne.s32.totalorder %s28, %s31
      %p37 = scmp.eq.s32.totalorder %s18, 0
      %p38 = por %p36, %p37
      %p39 = scmp.ne.s32.totalorder %s28, %s31
      %p40 = scmp.eq.s32.totalorder %s23, 2
      %p41 = por %p39, %p40
      %p42 = scmp.ne.s32.totalorder %s31, %s32
      %p43 = scmp.eq.s32.totalorder %s23, 0
      %p44 = por %p42, %p43
      %p45 = scmp.ne.s32.totalorder %s31, %s32
      %p46 = scmp.eq.s32.totalorder %s24, 2
      %p47 = por %p45, %p46
      %p49 = scmp.ne.s32.totalorder %s32, %s48
      %p50 = scmp.eq.s32.totalorder %s24, 0
      %p51 = por %p49, %p50
      %s53 = sadd.s32 %s52, 1
      %p56 = scmp.eq.s32.totalorder %s18, 2
      %p57 = scmp.ne.s32.totalorder %s52, %s54
      %p58 = scmp.eq.s32.totalorder %s18, 0
      %p59 = por %p57, %p58
      %p60 = scmp.ne.s32.totalorder %s52, %s54
      %p61 = scmp.eq.s32.totalorder %s23, 2
      %p62 = por %p60, %p61
      %p63 = scmp.ne.s32.totalorder %s54, %s55
      %p64 = scmp.eq.s32.totalorder %s23, 0
      %p65 = por %p63, %p64
      %p66 = scmp.ne.s32.totalorder %s54, %s55
      %p67 = scmp.eq.s32.totalorder %s24, 2
      %p68 = por %p66, %p67
      %p70 = scmp.ne.s32.totalorder %s55, %s69
      %p71 = scmp.eq.s32.totalorder %s24, 0
      %p72 = por %p70, %p71
      %s74 = sadd.s32 %s73, 1
      %p77 = scmp.eq.s32.totalorder %s18, 2
      %p78 = scmp.ne.s32.totalorder %s73, %s75
      %p79 = scmp.eq.s32.totalorder %s18, 0
      %p80 = por %p78, %p79
      %p81 = scmp.ne.s32.totalorder %s73, %s75
      %p82 = scmp.eq.s32.totalorder %s23, 2
      %p83 = por %p81, %p82
      %p84 = scmp.ne.s32.totalorder %s75, %s76
      %p85 = scmp.eq.s32.totalorder %s23, 0
      %p86 = por %p84, %p85
      %p87 = scmp.ne.s32.totalorder %s75, %s76
      %p88 = scmp.eq.s32.totalorder %s24, 2
      %p89 = por %p87, %p88
      %p91 = scmp.ne.s32.totalorder %s76, %s90
      %p92 = scmp.eq.s32.totalorder %s24, 0
      %p93 = por %p91, %p92
      %s95 = sadd.s32 %s94, 1
      %p98 = scmp.eq.s32.totalorder %s18, 2
      %p99 = scmp.ne.s32.totalorder %s94, %s96
      %p100 = scmp.eq.s32.totalorder %s18, 0
      %p101 = por %p99, %p100
      %p102 = scmp.ne.s32.totalorder %s94, %s96
      %p103 = scmp.eq.s32.totalorder %s23, 2
      %p104 = por %p102, %p103
      %p105 = scmp.ne.s32.totalorder %s96, %s97
      %p106 = scmp.eq.s32.totalorder %s23, 0
      %p107 = por %p105, %p106
      %p108 = scmp.ne.s32.totalorder %s96, %s97
      %p109 = scmp.eq.s32.totalorder %s24, 2
      %p110 = por %p108, %p109
      %p112 = scmp.ne.s32.totalorder %s97, %s111
      %p113 = scmp.eq.s32.totalorder %s24, 0
      %p114 = por %p112, %p113
      %s116 = sadd.s32 %s115, 1
      %p119 = scmp.eq.s32.totalorder %s18, 2
      %p120 = scmp.ne.s32.totalorder %s115, %s117
      %p121 = scmp.eq.s32.totalorder %s18, 0
      %p122 = por %p120, %p121
      %p123 = scmp.ne.s32.totalorder %s115, %s117
      %p124 = scmp.eq.s32.totalorder %s23, 2
      %p125 = por %p123, %p124
      %p126 = scmp.ne.s32.totalorder %s117, %s118
      %p127 = scmp.eq.s32.totalorder %s23, 0
      %p128 = por %p126, %p127
      %p129 = scmp.ne.s32.totalorder %s117, %s118
      %p130 = scmp.eq.s32.totalorder %s24, 2
      %p131 = por %p129, %p130
      %p133 = scmp.ne.s32.totalorder %s118, %s132
      %p134 = scmp.eq.s32.totalorder %s24, 0
      %p135 = por %p133, %p134
      %s136 = ssub.s32 %s18, %s25
      %p137 = scmp.eq.s32.totalorder %s136, 0
      %s139 = sadd.s32 %s138, 1
      %s140 = scalar_select %p137, %s138, %s139
      %p143 = pneg %p137
      %p144 = scmp.eq.s32.totalorder %s18, 2
      %p145 = por %p143, %p144
      %p146 = scmp.ne.s32.totalorder %s138, %s141
      %p147 = scmp.eq.s32.totalorder %s18, 0
      %p148 = por %p146, %p147
      %p149 = scmp.ne.s32.totalorder %s138, %s141
      %p150 = scmp.eq.s32.totalorder %s23, 2
      %p151 = por %p149, %p150
      %p152 = scmp.ne.s32.totalorder %s141, %s142
      %p153 = scmp.eq.s32.totalorder %s23, 0
      %p154 = por %p152, %p153
      %p155 = scmp.ne.s32.totalorder %s141, %s142
      %p156 = scmp.eq.s32.totalorder %s24, 2
      %p157 = por %p155, %p156
      %p159 = scmp.ne.s32.totalorder %s142, %s158
      %p160 = scmp.eq.s32.totalorder %s24, 0
      %p161 = por %p159, %p160
      %p162 = scmp.le.s32.totalorder 1, %s18
      %p163 = scmp.lt.s32.totalorder %s18, 4
      %p164 = pnand %p162, %p163
      %p165 = pneg %p164
      // Predicated region
      $region9: #{tpu_custom_call.1} parent=5 // pred_check
        _
      $region10: #{tpu_custom_call.1} parent=5 // pred_check_branch
        %167 = sbr.rel (%p164) target = $region12
      $region11: #{tpu_custom_call.1} parent=5 // pred_region
        %s168 = ssub.s32 %s18, 1
        // Predicated region
        $region13: #{tpu_custom_call.1} parent=11 // pred_check
          %p169 = pneg %p65
        $region14: #{tpu_custom_call.1} parent=11 // pred_check_branch
          %171 = sbr.rel (%p169) target = $region16
        $region15: #{tpu_custom_call.1} parent=11 // pred_region
          %173 = vsyncadd [#allocation6], 0
          %s174 = sshll.u32 %s1, 4
          %s175 = int_to_ptr.hbm [resolvable:$true] %s174
          %s176 = sshll.u32 [#allocation5], 4
          %s177 = int_to_ptr.vmem [resolvable:$true] %s176
          %182 = dma.hbm_to_vmem [thread:$0]  %s175, 1024, %s177, [#allocation6], 128, 128, 8
        $region16: #{tpu_custom_call.1} parent=11 // pred_fallthru
          _
        // Predicated region
        $region17: #{tpu_custom_call.1} parent=11 // pred_check
          %p183 = pneg %p86
        $region18: #{tpu_custom_call.1} parent=11 // pred_check_branch
          %185 = sbr.rel (%p183) target = $region20
        $region19: #{tpu_custom_call.1} parent=11 // pred_region
          _
        $region20: #{tpu_custom_call.1} parent=11 // pred_fallthru
          _
        // Predicated region
        $region21: #{tpu_custom_call.1} parent=11 // pred_check
          %p186 = pneg %p107
        $region22: #{tpu_custom_call.1} parent=11 // pred_check_branch
          %188 = sbr.rel (%p186) target = $region24
        $region23: #{tpu_custom_call.1} parent=11 // pred_region
          %190 = vsyncadd [#allocation6], 0
          %s191 = sshll.u32 %s3, 4
          %s192 = int_to_ptr.hbm [resolvable:$true] %s191
          %s193 = sshll.u32 [#allocation7], 4
          %s194 = int_to_ptr.vmem [resolvable:$true] %s193
          %199 = dma.hbm_to_vmem [thread:$0]  %s192, 4096, %s194, [#allocation6], 256, 256, 16
        $region24: #{tpu_custom_call.1} parent=11 // pred_fallthru
          _
        // Predicated region
        $region25: #{tpu_custom_call.1} parent=11 // pred_check
          %p200 = pneg %p128
        $region26: #{tpu_custom_call.1} parent=11 // pred_check_branch
          %202 = sbr.rel (%p200) target = $region28
        $region27: #{tpu_custom_call.1} parent=11 // pred_region
          _
        $region28: #{tpu_custom_call.1} parent=11 // pred_fallthru
          _
      $region12: #{tpu_custom_call.1} parent=5 // pred_fallthru
        _
      %p203 = scmp.lt.s32.totalorder %s18, 3
      // Predicated region
      $region29: #{tpu_custom_call.1} parent=5 // pred_check
        %p204 = pneg %p203
      $region30: #{tpu_custom_call.1} parent=5 // pred_check_branch
        %206 = sbr.rel (%p204) target = $region32
      $region31: #{tpu_custom_call.1} parent=5 // pred_region
        // Predicated region
        $region33: #{tpu_custom_call.1} parent=31 // pred_check
          %p207 = pneg %p38
        $region34: #{tpu_custom_call.1} parent=31 // pred_check_branch
          %209 = sbr.rel (%p207) target = $region36
        $region35: #{tpu_custom_call.1} parent=31 // pred_region
          %s210 = sand.u32 %s28, 1
          %s211 = scalar_lea.sflag [#allocation3], %s210
          %s212 = sand.u32 %s28, 1
          %s213 = smul.addr %s212, 16
          %s214 = scalar_lea.vmem [#allocation2], %s213
          %s215 = smul.u32 2, %s18
          %217 = vsyncadd %s211, 0
          %s218 = smul.addr %s215, 8
          %s219 = scalar_lea.hbm %s0, %s218
          %s220 = sshll.u32 %s219, 4
          %s221 = int_to_ptr.hbm [resolvable:$true] %s220
          %s222 = sshll.u32 %s214, 4
          %s223 = int_to_ptr.vmem [resolvable:$true] %s222
          %228 = dma.hbm_to_vmem [thread:$0]  %s221, 256, %s223, %s211, 128, 128, 8
        $region36: #{tpu_custom_call.1} parent=31 // pred_fallthru
          _
      $region32: #{tpu_custom_call.1} parent=5 // pred_fallthru
        _
      %p229 = scmp.le.s32.totalorder 1, %s18
      %p230 = scmp.lt.s32.totalorder %s18, 4
      %p231 = pnand %p229, %p230
      %p232 = pneg %p231
      // Predicated region
      $region37: #{tpu_custom_call.1} parent=5 // pred_check
        _
      $region38: #{tpu_custom_call.1} parent=5 // pred_check_branch
        %234 = sbr.rel (%p231) target = $region40
      $region39: #{tpu_custom_call.1} parent=5 // pred_region
        %s235 = ssub.s32 %s18, 1
        %s236 = sand.u32 %s31, 1
        %s237 = scalar_lea.sflag [#allocation3], %s236
        %s238 = sand.u32 %s31, 1
        %s239 = smul.addr %s238, 16
        %s240 = scalar_lea.vmem [#allocation2], %s239
        // Predicated region
        $region41: #{tpu_custom_call.1} parent=39 // pred_check
          %p241 = pneg %p44
        $region42: #{tpu_custom_call.1} parent=39 // pred_check_branch
          %243 = sbr.rel (%p241) target = $region44
        $region43: #{tpu_custom_call.1} parent=39 // pred_region
          %245 = dma.done %s237, 256
        $region44: #{tpu_custom_call.1} parent=39 // pred_fallthru
          _
        // Predicated region
        $region45: #{tpu_custom_call.1} parent=39 // pred_check
          %p246 = pneg %p65
        $region46: #{tpu_custom_call.1} parent=39 // pred_check_branch
          %248 = sbr.rel (%p246) target = $region48
        $region47: #{tpu_custom_call.1} parent=39 // pred_region
          %250 = dma.done [#allocation6], 1024
        $region48: #{tpu_custom_call.1} parent=39 // pred_fallthru
          _
        // Predicated region
        $region49: #{tpu_custom_call.1} parent=39 // pred_check
          %p251 = pneg %p107
        $region50: #{tpu_custom_call.1} parent=39 // pred_check_branch
          %253 = sbr.rel (%p251) target = $region52
        $region51: #{tpu_custom_call.1} parent=39 // pred_region
          %255 = dma.done [#allocation6], 4096
        $region52: #{tpu_custom_call.1} parent=39 // pred_fallthru
          _
        %s256 = sand.u32 %s31, 1
        %s257 = scalar_lea.sflag [#allocation3], %s256
        %s258 = sand.u32 %s31, 1
        %s259 = smul.addr %s258, 16
        %s260 = scalar_lea.vmem [#allocation2], %s259
        %p261 = pneg %p44
        %p262 = pneg %p41
        %p263 = pneg %p65
        %p264 = pneg %p62
        %p265 = pneg %p86
        %p266 = pneg %p83
        %p267 = pneg %p107
        %p268 = pneg %p104
        %p269 = pneg %p128
        %p270 = pneg %p125
        %p271 = pneg %p154
        %p272 = pneg %p151
        %s273 = sand.u32 %s141, 1
        %s274 = scalar_lea.sflag [#allocation4], %s273
        %s275 = sand.u32 %s141, 1
        %s276 = smul.addr %s275, 32
        %s277 = scalar_lea.vmem [#allocation8], %s276
        %s278 = smul.u32 2, %s23
        %s279 = smul.u32 2, %s23
        %v280 = vld [vmem:[%s240] sm:$0xff]
        %v281 = vld [vmem:[%s240 + $0x8] sm:$0xff]
        %v282 = vld [vmem:[#allocation5] sm:$0xff]
        %v283 = vld [vmem:[#allocation5 + $0x8] sm:$0xff]
        %v284 = vld [vmem:[#allocation5 + $0x10] sm:$0xff]
        %v285 = vld [vmem:[#allocation5 + $0x18] sm:$0xff]
        %v286 = vld [vmem:[#allocation5 + $0x20] sm:$0xff]
        %v287 = vld [vmem:[#allocation5 + $0x28] sm:$0xff]
        %v288 = vld [vmem:[#allocation5 + $0x30] sm:$0xff]
        %v289 = vld [vmem:[#allocation5 + $0x38] sm:$0xff]
        %v290 = vld [vmem:[%s2] sm:$0x1]
        %v292 = vperm.slane %v290, 0
        %vm294 = vcmask 523264
        %v296 = vsel %vm294, %v280, 0
        %v299 = vsel %vm294, %v281, 0
        %301 = vmatpush.msra.mxu0 0.0
        %302 = vmatpush.msra.mxu0 0.0
        %303 = vmatpush.msra.mxu0 0.0
        %304 = vmatpush.msra.mxu0 0.0
        %305 = vmatpush.msra.mxu0 0.0
        %306 = vmatpush.msra.mxu0 0.0
        %307 = vmatpush.msra.mxu0 0.0
        %308 = vmatpush.msra.mxu0 0.0
        %309 = vmatpush.msra.mxu0 %v289
        %310 = vmatpush.msra.mxu0 %v288
        %311 = vmatpush.msra.mxu0 %v287
        %312 = vmatpush.msra.mxu0 %v286
        %313 = vmatpush.msra.mxu0 %v285
        %314 = vmatpush.msra.mxu0 %v284
        %315 = vmatpush.msra.mxu0 %v283
        %316 = vmatpush.msra.mxu0 %v282
        %317 = vmatmul.f32.gmra.mxu0 %v296
        %v318 = vpop.f32.mrf.mxu0
        %v319 = vadd.f32 %v292, %v318
        %320 = vmatmul.f32.gmra.mxu0 %v299
        %v321 = vpop.f32.mrf.mxu0
        %v322 = vadd.f32 %v292, %v321
        %323 = vdwg.mxu0
        %v324 = vmax.f32 %v319, 0.0
        %v325 = vmax.f32 %v322, 0.0
        %v326 = vld [vmem:[#allocation7] sm:$0xff]
        %v327 = vld [vmem:[#allocation7 + $0x8] sm:$0xff]
        %v328 = vld [vmem:[#allocation7 + $0x10] sm:$0xff]
        %v329 = vld [vmem:[#allocation7 + $0x18] sm:$0xff]
        %v330 = vld [vmem:[#allocation7 + $0x20] sm:$0xff]
        %v331 = vld [vmem:[#allocation7 + $0x28] sm:$0xff]
        %v332 = vld [vmem:[#allocation7 + $0x30] sm:$0xff]
        %v333 = vld [vmem:[#allocation7 + $0x38] sm:$0xff]
        %v334 = vld [vmem:[#allocation7 + $0x40] sm:$0xff]
        %v335 = vld [vmem:[#allocation7 + $0x48] sm:$0xff]
        %v336 = vld [vmem:[#allocation7 + $0x50] sm:$0xff]
        %v337 = vld [vmem:[#allocation7 + $0x58] sm:$0xff]
        %v338 = vld [vmem:[#allocation7 + $0x60] sm:$0xff]
        %v339 = vld [vmem:[#allocation7 + $0x68] sm:$0xff]
        %v340 = vld [vmem:[#allocation7 + $0x70] sm:$0xff]
        %v341 = vld [vmem:[#allocation7 + $0x78] sm:$0xff]
        %v342 = vld [vmem:[#allocation7 + $0x80] sm:$0xff]
        %v343 = vld [vmem:[#allocation7 + $0x88] sm:$0xff]
        %v344 = vld [vmem:[#allocation7 + $0x90] sm:$0xff]
        %v345 = vld [vmem:[#allocation7 + $0x98] sm:$0xff]
        %v346 = vld [vmem:[#allocation7 + $0xa0] sm:$0xff]
        %v347 = vld [vmem:[#allocation7 + $0xa8] sm:$0xff]
        %v348 = vld [vmem:[#allocation7 + $0xb0] sm:$0xff]
        %v349 = vld [vmem:[#allocation7 + $0xb8] sm:$0xff]
        %v350 = vld [vmem:[#allocation7 + $0xc0] sm:$0xff]
        %v351 = vld [vmem:[#allocation7 + $0xc8] sm:$0xff]
        %v352 = vld [vmem:[#allocation7 + $0xd0] sm:$0xff]
        %v353 = vld [vmem:[#allocation7 + $0xd8] sm:$0xff]
        %v354 = vld [vmem:[#allocation7 + $0xe0] sm:$0xff]
        %v355 = vld [vmem:[#allocation7 + $0xe8] sm:$0xff]
        %v356 = vld [vmem:[#allocation7 + $0xf0] sm:$0xff]
        %v357 = vld [vmem:[#allocation7 + $0xf8] sm:$0xff]
        %v358 = vld [vmem:[%s4] sm:$0x3]
        %v360 = vperm.slane %v358, 0
        %v361 = vperm.slane %v358, 1
        %364 = vmatpush.msra.mxu0 %v356
        %365 = vmatpush.msra.mxu0 %v354
        %366 = vmatpush.msra.mxu0 %v352
        %367 = vmatpush.msra.mxu0 %v350
        %368 = vmatpush.msra.mxu0 %v348
        %369 = vmatpush.msra.mxu0 %v346
        %370 = vmatpush.msra.mxu0 %v344
        %371 = vmatpush.msra.mxu0 %v342
        %372 = vmatpush.msra.mxu0 %v340
        %373 = vmatpush.msra.mxu0 %v338
        %374 = vmatpush.msra.mxu0 %v336
        %375 = vmatpush.msra.mxu0 %v334
        %376 = vmatpush.msra.mxu0 %v332
        %377 = vmatpush.msra.mxu0 %v330
        %378 = vmatpush.msra.mxu0 %v328
        %379 = vmatpush.msra.mxu0 %v326
        %380 = vmatmul.f32.gmra.mxu0 %v324
        %v381 = vpop.f32.mrf.mxu0
        %v382 = vadd.f32 %v360, %v381
        %383 = vmatmul.f32.gmra.mxu0 %v325
        %v384 = vpop.f32.mrf.mxu0
        %v385 = vadd.f32 %v360, %v384
        %386 = vdwg.mxu0
        %387 = vmatpush.msra.mxu0 %v357
        %388 = vmatpush.msra.mxu0 %v355
        %389 = vmatpush.msra.mxu0 %v353
        %390 = vmatpush.msra.mxu0 %v351
        %391 = vmatpush.msra.mxu0 %v349
        %392 = vmatpush.msra.mxu0 %v347
        %393 = vmatpush.msra.mxu0 %v345
        %394 = vmatpush.msra.mxu0 %v343
        %395 = vmatpush.msra.mxu0 %v341
        %396 = vmatpush.msra.mxu0 %v339
        %397 = vmatpush.msra.mxu0 %v337
        %398 = vmatpush.msra.mxu0 %v335
        %399 = vmatpush.msra.mxu0 %v333
        %400 = vmatpush.msra.mxu0 %v331
        %401 = vmatpush.msra.mxu0 %v329
        %402 = vmatpush.msra.mxu0 %v327
        %403 = vmatmul.f32.gmra.mxu0 %v324
        %v404 = vpop.f32.mrf.mxu0
        %v405 = vadd.f32 %v361, %v404
        %406 = vmatmul.f32.gmra.mxu0 %v325
        %v407 = vpop.f32.mrf.mxu0
        %v408 = vadd.f32 %v361, %v407
        %409 = vdwg.mxu0
        %v410 = vmul.f32 %v382, %v382
        %v411 = vmul.f32 %v385, %v385
        %412 = vadd.xlane.f32.xlu0 %v410
        %v413 = vpop.xlane.xlu0 %412
        %414 = vadd.xlane.f32.xlu0 %v411
        %v415 = vpop.xlane.xlu0 %414
        %v416 = vrsqrt.pop %v413
        %v417 = vmul.f32 %v416, %v413
        %v418 = vmul.f32 %v417, %v416
        %v419 = vmul.f32 0.5, %v418
        %v420 = vsub.f32 1.5, %v419
        %v421 = vmul.f32 %v416, %v420
        %vm422 = vweird.f32 %v413
        %vm423 = vweird.f32 %v416
        %vm424 = vmor %vm422, %vm423
        %v425 = vsel %vm424, %v416, %v421
        %v426 = vrsqrt.pop %v415
        %v427 = vmul.f32 %v426, %v415
        %v428 = vmul.f32 %v427, %v426
        %v429 = vmul.f32 0.5, %v428
        %v430 = vsub.f32 1.5, %v429
        %v431 = vmul.f32 %v426, %v430
        %vm432 = vweird.f32 %v415
        %vm433 = vweird.f32 %v426
        %vm434 = vmor %vm432, %vm433
        %v435 = vsel %vm434, %v426, %v431
        %v436 = vmul.f32 %v382, %v425
        %v437 = vmul.f32 %v385, %v435
        %438 = vst [vmem:[%s277] sm:$0xff] %v436
        %439 = vst [vmem:[%s277 + $0x10] sm:$0xff] %v437
        %v440 = vadd.f32 %v405, 1.0
        %v441 = vadd.f32 %v408, 1.0
        %442 = vst [vmem:[%s277 + $0x8] sm:$0xff] %v440
        %443 = vst [vmem:[%s277 + $0x18] sm:$0xff] %v441
        %s444 = sand.u32 %s141, 1
        %s445 = scalar_lea.sflag [#allocation4], %s444
        %s446 = sand.u32 %s141, 1
        %s447 = smul.addr %s446, 32
        %s448 = scalar_lea.vmem [#allocation8], %s447
        // Predicated region
        $region53: #{tpu_custom_call.1} parent=39 // pred_check
          %p449 = pneg %p151
        $region54: #{tpu_custom_call.1} parent=39 // pred_check_branch
          %451 = sbr.rel (%p449) target = $region56
        $region55: #{tpu_custom_call.1} parent=39 // pred_region
          %s452 = smul.u32 2, %s23
          %454 = vsyncadd %s445, 0
          %s455 = smul.addr %s452, 2
          %s456 = smul.addr %s455, 8
          %s457 = scalar_lea.hbm %s5, %s456
          %s458 = sshll.u32 %s448, 4
          %s459 = int_to_ptr.vmem [resolvable:$true] %s458
          %s460 = sshll.u32 %s457, 4
          %s461 = int_to_ptr.hbm [resolvable:$true] %s460
          %466 = dma.vmem_to_hbm [thread:$0]  %s459, 512, %s461, %s445, 256, 256, 16
        $region56: #{tpu_custom_call.1} parent=39 // pred_fallthru
          _
      $region40: #{tpu_custom_call.1} parent=5 // pred_fallthru
        _
      %p467 = scmp.le.s32.totalorder 2, %s18
      // Predicated region
      $region57: #{tpu_custom_call.1} parent=5 // pred_check
        %p468 = pneg %p467
      $region58: #{tpu_custom_call.1} parent=5 // pred_check_branch
        %470 = sbr.rel (%p468) target = $region60
      $region59: #{tpu_custom_call.1} parent=5 // pred_region
        %s471 = ssub.s32 %s18, 2
        // Predicated region
        $region61: #{tpu_custom_call.1} parent=59 // pred_check
          %p472 = pneg %p157
        $region62: #{tpu_custom_call.1} parent=59 // pred_check_branch
          %474 = sbr.rel (%p472) target = $region64
        $region63: #{tpu_custom_call.1} parent=59 // pred_region
          %s475 = sand.u32 %s142, 1
          %s476 = scalar_lea.sflag [#allocation4], %s475
          %s477 = sand.u32 %s142, 1
          %s478 = smul.addr %s477, 32
          %s479 = scalar_lea.vmem [#allocation8], %s478
          %481 = dma.done %s476, 512
        $region64: #{tpu_custom_call.1} parent=59 // pred_fallthru
          _
      $region60: #{tpu_custom_call.1} parent=5 // pred_fallthru
        _
    $region6: #{tpu_custom_call.1} parent=1 // loop_footer
      %s22 = sadd.s32 1, %s18
    $region7: #{tpu_custom_call.1} parent=1 // loop_footer_branch
      %17 = sbr.rel target = $region3
    $region8: #{tpu_custom_call.1} parent=1 // loop_exit
      _
    %482 = vsyncpa [#allocation3], 1
    %s483 = scalar_lea.sflag [#allocation3], 1
    %484 = vsyncpa %s483, 1
    %485 = vsyncpa [#allocation6], 1
    %486 = vsyncpa [#allocation4], 1
    %s487 = scalar_lea.sflag [#allocation4], 1
    %488 = vsyncpa %s487, 1

</llo_original>
